<compile_context>
chip_gen: v6e
topology: v6e:2x2x1
jax: 0.10.0
libtpu: 0.0.40
codegen_flags: <defaults>
</compile_context>

<pallas_src>
import jax
import jax.numpy as jnp
from jax.experimental import pallas as pl
from jax.experimental.pallas import tpu as pltpu

_LANES = 128  # vreg lane width


def _hswish_kernel(x_ref, o_ref):
    x = x_ref[...]
    # x * relu6(x + 3) / 6  ==  x * clip(x + 3, 0, 6) * (1/6)
    o_ref[...] = x * jnp.clip(x + 3.0, 0.0, 6.0) * (1.0 / 6.0)


def hswish(x, *, max_block_rows=2048):
    """Elementwise Hswish on an arbitrarily-shaped array via a tiled Pallas kernel."""
    orig_shape = x.shape
    orig_dtype = x.dtype
    n = x.size

    # Lay out as (rows, 128): lane-dense, rows padded to a multiple of the
    # block height (itself a multiple of 8) so every BlockSpec tile is full.
    rows = pl.cdiv(n, _LANES)
    block_rows = min(max_block_rows, pl.cdiv(rows, 8) * 8)
    grid = pl.cdiv(rows, block_rows)
    padded_rows = grid * block_rows

    xf = jnp.ravel(x).astype(jnp.float32)
    xf = jnp.pad(xf, (0, padded_rows * _LANES - n))
    x2 = xf.reshape(padded_rows, _LANES)

    out = pl.pallas_call(
        _hswish_kernel,
        out_shape=jax.ShapeDtypeStruct((padded_rows, _LANES), jnp.float32),
        grid=(grid,),
        in_specs=[pl.BlockSpec((block_rows, _LANES), lambda i: (i, 0))],
        out_specs=pl.BlockSpec((block_rows, _LANES), lambda i: (i, 0)),
        compiler_params=pltpu.CompilerParams(
            dimension_semantics=("parallel",)),
    )(x2)

    return out.reshape(-1)[:n].reshape(orig_shape).astype(orig_dtype)


def _hswish_ref(x):
    """Pure-JAX reference matching torch: x * relu6(x + 3) / 6."""
    return x * jnp.clip(x + 3.0, 0.0, 6.0) / 6.0


if __name__ == "__main__":
    key = jax.random.PRNGKey(0)
    # Small NCHW-style input consistent with how the module is typically used.
    x = 3.0 * jax.random.normal(key, (2, 4, 16, 16), jnp.float32)

    out = jax.block_until_ready(hswish(x))
    ref = jax.block_until_ready(_hswish_ref(x))

    assert out.shape == x.shape, out.shape
    assert jnp.allclose(out, ref, rtol=1e-6, atol=1e-6), (out, ref)
    print("KERNEL_OK")
</pallas_src>

<mosaic_0001>
module attributes {stable_mosaic.version = 11 : i64} {
  func.func @_hswish_kernel(%arg0: i32, %arg1: memref<16x128xf32, #tpu.memory_space<vmem>>, %arg2: memref<16x128xf32, #tpu.memory_space<vmem>>) attributes {dimension_semantics = [#tpu.dimension_semantics<parallel>], iteration_bounds = array<i64: 1>, scalar_prefetch = 0 : i64, scratch_operands = 0 : i64, tpu.core_type = #tpu.core_type<tc>, window_params = [{transform_indices = @transform_0, window_bounds = array<i64: 16, 128>}, {transform_indices = @transform_1, window_bounds = array<i64: 16, 128>}]} {
    %c0 = arith.constant 0 : index
    %c0_0 = arith.constant 0 : index
    %0 = vector.load %arg1[%c0, %c0_0] : memref<16x128xf32, #tpu.memory_space<vmem>>, vector<16x128xf32>
    %cst = arith.constant 3.000000e+00 : f32
    %1 = vector.broadcast %cst : f32 to vector<16x128xf32>
    %2 = arith.addf %0, %1 : vector<16x128xf32>
    %cst_1 = arith.constant 0.000000e+00 : f32
    %cst_2 = arith.constant 6.000000e+00 : f32
    %3 = vector.broadcast %cst_1 : f32 to vector<16x128xf32>
    %4 = arith.maximumf %3, %2 : vector<16x128xf32>
    %5 = vector.broadcast %cst_2 : f32 to vector<16x128xf32>
    %6 = arith.minimumf %5, %4 : vector<16x128xf32>
    %7 = arith.mulf %0, %6 : vector<16x128xf32>
    %cst_3 = arith.constant 0.166666672 : f32
    %8 = vector.broadcast %cst_3 : f32 to vector<16x128xf32>
    %9 = arith.mulf %7, %8 : vector<16x128xf32>
    %c0_4 = arith.constant 0 : index
    %c0_5 = arith.constant 0 : index
    %10 = vector.load %arg2[%c0_4, %c0_5] : memref<16x128xf32, #tpu.memory_space<vmem>>, vector<16x128xf32>
    tpu.vector_store %arg2[%c0_4, %c0_5], %9 {strides = array<i32>} : memref<16x128xf32, #tpu.memory_space<vmem>>, vector<16x128xf32>,
    return
  }
  func.func @transform_0(%arg0: i32) -> (i32, i32) {
    %c0_i32 = arith.constant 0 : i32
    %c0_i32_0 = arith.constant 0 : i32
    return %arg0, %c0_i32 : i32, i32
  }
  func.func @transform_1(%arg0: i32) -> (i32, i32) {
    %c0_i32 = arith.constant 0 : i32
    %c0_i32_0 = arith.constant 0 : i32
    return %arg0, %c0_i32 : i32, i32
  }
}

</mosaic_0001>

<llo_original>
// kernel: tpu_custom_call.1
$region0: #{tpu_custom_call.1}
  #allocation0 [shape = 'u32[]', space=smem, size = 0x4, offset = 0x4, fixed_abs, tag = 'smem constant byte address 0x4 - core index']
  #allocation1 [shape = 'u32[144,128]{1,0:T(1,128)}', space=vmem, size = 0x12000, scoped, tag = 'internal scratch']
  %s0 = inlined_call_operand.hbm [shape: f32[16,128], index: 0, kind: input, shape index: {}]
  %s1 = inlined_call_operand.hbm [shape: f32[16,128], index: 1, kind: output, shape index: {}]
  %s2 = sld [smem:[#allocation0]]
  $region18: #{tpu_custom_call.1} parent=0
    _
  %s4 = ssub.s32 1, %s2
  %s5 = scalar_select 0, %s4, %s2
  $region1: #{tpu_custom_call.1} parent=0
    #allocation2 [shape = 'u8[8192]{0}', space=vmem, size = 0x2000, scoped, tag = 'input window, operand 0, single buffered']
    #allocation3 [shape = 's32[1]{0}', space=sflag, size = 0x4, scoped, tag = 'scoped memory for tpu_custom_call.1']
    #allocation4 [shape = 's32[1]{0}', space=sflag, size = 0x4, scoped, tag = 'scoped memory for tpu_custom_call.1']
    #allocation5 [shape = 'u8[8192]{0}', space=vmem, size = 0x2000, scoped, tag = 'output window, operand 0, single buffered']
    %6 = vsyncpa [#allocation3], 0
    %7 = vsyncpa [#allocation4], 0
    // Predicated region
    $region2: #{tpu_custom_call.1} parent=1 // pred_check
      _
    $region3: #{tpu_custom_call.1} parent=1 // pred_check_branch
      %9 = sbr.rel (0) target = $region5
    $region4: #{tpu_custom_call.1} parent=1 // pred_region
      %s11 = ssub.s32 256, 256
      %12 = vsyncadd [#allocation3], %s11
      %s13 = sshll.u32 [#allocation2], 4
      %s14 = int_to_ptr.vmem [resolvable:$true] %s13
      %19 = dma.hbm_to_vmem [thread:$0]  %s0, 256, %s14, [#allocation3], 128, 128, 8
    $region5: #{tpu_custom_call.1} parent=1 // pred_fallthru
      _
    // Predicated region
    $region6: #{tpu_custom_call.1} parent=1 // pred_check
      _
    $region7: #{tpu_custom_call.1} parent=1 // pred_check_branch
      %21 = sbr.rel (0) target = $region9
    $region8: #{tpu_custom_call.1} parent=1 // pred_region
      %22 = dma.done [#allocation3], 256
    $region9: #{tpu_custom_call.1} parent=1 // pred_fallthru
      _
    %v23 = vld [vmem:[#allocation2] sm:$0xff]
    %v24 = vld [vmem:[#allocation2 + $0x8] sm:$0xff]
    %v25 = vadd.f32 %v23, 3.0
    %v26 = vadd.f32 %v24, 3.0
    %v27 = vmax.f32 %v25, 0.0
    %v28 = vmax.f32 %v26, 0.0
    %v29 = vmin.f32 %v27, 6.0
    %v30 = vmin.f32 %v28, 6.0
    %v31 = vmul.f32 %v23, %v29
    %v32 = vmul.f32 %v24, %v30
    %v33 = vmul.f32 %v31, 0.16666667
    %v34 = vmul.f32 %v32, 0.16666667
    %35 = vst [vmem:[#allocation5] sm:$0xff] %v33
    %36 = vst [vmem:[#allocation5 + $0x8] sm:$0xff] %v34
    // Predicated region
    $region10: #{tpu_custom_call.1} parent=1 // pred_check
      _
    $region11: #{tpu_custom_call.1} parent=1 // pred_check_branch
      %38 = sbr.rel (0) target = $region13
    $region12: #{tpu_custom_call.1} parent=1 // pred_region
      %s40 = ssub.s32 256, 256
      %41 = vsyncadd [#allocation4], %s40
      %s42 = sshll.u32 [#allocation5], 4
      %s43 = int_to_ptr.vmem [resolvable:$true] %s42
      %48 = dma.vmem_to_hbm [thread:$0]  %s43, 256, %s1, [#allocation4], 128, 128, 8
    $region13: #{tpu_custom_call.1} parent=1 // pred_fallthru
      _
    // Predicated region
    $region14: #{tpu_custom_call.1} parent=1 // pred_check
      _
    $region15: #{tpu_custom_call.1} parent=1 // pred_check_branch
      %50 = sbr.rel (0) target = $region17
    $region16: #{tpu_custom_call.1} parent=1 // pred_region
      %51 = dma.done [#allocation4], 256
    $region17: #{tpu_custom_call.1} parent=1 // pred_fallthru
      _
    %52 = vsyncpa [#allocation3], 1
    %53 = vsyncpa [#allocation4], 1

</llo_original>
